<compile_context>
chip_gen: v7x
topology: tpu7x:2x2x1
jax: 0.10.0
libtpu: 0.0.40
codegen_flags: <defaults>
</compile_context>

<pallas_src>
import functools

import jax
import jax.numpy as jnp
from jax.experimental import pallas as pl
from jax.experimental.pallas import tpu as pltpu


def _loss_multi_kernel(x_ref, t_ref, nll_ref, *stats_refs, with_jaccard):
    # Grid: (N, n_outer, n_inner). Axis 2 is the accumulation axis.
    i = pl.program_id(2)
    stats_ref = stats_refs[0] if with_jaccard else None

    @pl.when(i == 0)
    def _():
        nll_ref[...] = jnp.zeros_like(nll_ref)
        if with_jaccard:
            stats_ref[...] = jnp.zeros_like(stats_ref)

    C = x_ref.shape[1]          # classes
    TS = x_ref.shape[2]         # 128-pixel rows in this DMA block
    SA = nll_ref.shape[2]       # accumulator sublane extent (8 or TS)
    G = TS // SA                # compute chunks per block

    def chunk(g):
        r0 = g * SA
        if not isinstance(r0, int):
            r0 = pl.multiple_of(r0, SA)
        x = x_ref[0, :, pl.ds(r0, SA), :].astype(jnp.float32)   # (C, SA, 128)
        t = t_ref[0, :, pl.ds(r0, SA), :]                        # (1, SA, 128)

        # --- log-softmax pieces over the class (leading) axis, one exp ---
        m = jnp.max(x, axis=0, keepdims=True)                    # (1, SA, 128)
        z = x - m
        e = jnp.exp(z)                                           # EUP, once
        s = jnp.sum(e, axis=0, keepdims=True)                    # (1, SA, 128)
        lse = jnp.log(s)

        # Boolean class mask (no f32 one-hot materialization).
        cls_ids = jax.lax.broadcasted_iota(jnp.int32, (C, SA, 128), 0)
        mask = cls_ids == t                                      # (C, SA, 128)

        # NLL: sum_pixels (lse - z[target]).  (Targets outside [0, C) are
        # undefined behaviour, as in nn.NLLLoss.)
        zt = jnp.sum(jnp.where(mask, z, 0.0), axis=0, keepdims=True)
        nll_ref[0, 0] += (lse - zt)[0]                           # (SA, 128)

        if with_jaccard:
            inv_s = pl.reciprocal(s, approx=True)                # EUP slot
            prob = e * inv_s                                     # softmax probs
            stats_ref[0, 0, 0:C] += prob                         # prob mass / class
            stats_ref[0, 0, C:2 * C] += jnp.where(mask, prob, 0.0)  # intersection

    if G == 1:
        chunk(0)
    else:
        @pl.loop(0, G)
        def _(g):
            chunk(g)


def _pick_row_tile(R, C, in_bytes, with_jaccard, budget_bytes, max_rows=512):
    """Rows (of 128 pixels) per grid step: biggest block that fits the VMEM
    budget (double-buffered inputs + accumulators + per-chunk working set)."""

    def sa_of(ts):
        return 8 if ts % 8 == 0 else ts

    def footprint(ts):
        sa = sa_of(ts)
        blk_in = 2 * (C * ts * 128 * in_bytes + ts * 128 * 4)    # 2x-buffered inputs
        acc = sa * 128 * 4 + (2 * C * sa * 128 * 4 if with_jaccard else 0)
        work = 8 * C * sa * 128 * 4                              # chunk temporaries
        return blk_in + 2 * acc + work

    if R % 8 != 0:
        # Only the full extent is layout-legal (no multiple-of-8 divisor).
        # TODO(synk): masked tail tiles would remove this VMEM hazard for
        # large R that is not a multiple of 8.
        return R, footprint(R)
    if R <= max_rows and footprint(R) <= budget_bytes:
        return R, footprint(R)
    best = 8
    for ts in range(8, min(R, max_rows) + 1, 8):
        if R % ts == 0 and footprint(ts) <= budget_bytes:
            best = ts
    return best, footprint(best)


@functools.partial(jax.jit, static_argnames=("num_classes", "jaccard_weight"))
def loss_multi(logits_nchw, targets_nhw, *, num_classes, jaccard_weight=0.0):
    N, C, H, W = logits_nchw.shape
    assert C == num_classes
    HW = H * W
    # TODO(synk): general spatial sizes need a masked tail tile; demo shapes
    # keep HW a multiple of 128.
    assert HW % 128 == 0
    R = HW // 128                               # 128-pixel "rows" per image

    with_jaccard = bool(jaccard_weight)
    in_bytes = jnp.dtype(logits_nchw.dtype).itemsize
    # Tile budget fits v5e's 16 MiB scoped-VMEM default; explicit limit below
    # gives headroom and stays <= 48 MiB for v7x's 64 MiB physical VMEM.
    budget = 12 * 1024 * 1024
    TS, fp = _pick_row_tile(R, C, in_bytes, with_jaccard, budget)
    SA = 8 if TS % 8 == 0 else TS               # accumulator sublane extent
    n_tiles = R // TS
    n_outer = 2 if (n_tiles % 2 == 0 and n_tiles >= 2) else 1
    n_inner = n_tiles // n_outer
    vmem_limit = int(min(48 * 1024 * 1024, max(2 * fp + 2 * 1024 * 1024,
                                               16 * 1024 * 1024)))

    # Free reshapes only -- no HBM transpose, no wrapper-side dtype cast.
    x = logits_nchw.reshape(N, C, R, 128)
    t = targets_nhw.reshape(N, 1, R, 128).astype(jnp.int32)

    out_shape = [jax.ShapeDtypeStruct((N, n_outer, SA, 128), jnp.float32)]
    out_specs = [pl.BlockSpec((1, 1, SA, 128), lambda n, o, i: (n, o, 0, 0))]
    if with_jaccard:
        out_shape.append(
            jax.ShapeDtypeStruct((N, n_outer, 2 * C, SA, 128), jnp.float32))
        out_specs.append(
            pl.BlockSpec((1, 1, 2 * C, SA, 128), lambda n, o, i: (n, o, 0, 0, 0)))

    outs = pl.pallas_call(
        functools.partial(_loss_multi_kernel, with_jaccard=with_jaccard),
        out_shape=tuple(out_shape),
        grid_spec=pltpu.PrefetchScalarGridSpec(
            num_scalar_prefetch=0,
            grid=(N, n_outer, n_inner),
            in_specs=[
                pl.BlockSpec((1, C, TS, 128),
                             lambda n, o, i: (n, 0, o * n_inner + i, 0)),
                pl.BlockSpec((1, 1, TS, 128),
                             lambda n, o, i: (n, 0, o * n_inner + i, 0)),
            ],
            out_specs=tuple(out_specs),
        ),
        compiler_params=pltpu.CompilerParams(
            dimension_semantics=("parallel", "parallel", "arbitrary"),
            vmem_limit_bytes=vmem_limit,
        ),
    )(x, t)

    nll_part = outs[0]

    # Tiny finalization glue: single cross-lane reduce over small partials.
    P = N * HW
    nll_mean = jnp.sum(nll_part) / P                  # NLLLoss mean reduction
    loss = (1.0 - jaccard_weight) * nll_mean
    if with_jaccard:
        eps = 1e-15
        st = jnp.sum(outs[1], axis=(0, 1, 3, 4))      # (2*C,)
        prob_sum = st[0:C]
        inter = st[C:2 * C]
        # Per-class target counts are logits-independent -> computed here.
        tgt_sum = jnp.sum(
            jax.nn.one_hot(targets_nhw.reshape(-1), num_classes,
                           dtype=jnp.float32), axis=0)
        union = prob_sum + tgt_sum
        loss = loss - jnp.sum(
            jnp.log((inter + eps) / (union - inter + eps))
        ) * jaccard_weight / num_classes
    return loss


def _loss_multi_ref(logits_nchw, targets_nhw, num_classes, jaccard_weight):
    """Pure-JAX reference mirroring the PyTorch forward."""
    x = logits_nchw.astype(jnp.float32)
    ls = jax.nn.log_softmax(x, axis=1)                         # (N, C, H, W)
    onehot = jax.nn.one_hot(targets_nhw, num_classes, axis=1)  # (N, C, H, W)
    nll = -jnp.sum(ls * onehot) / targets_nhw.size
    loss = (1.0 - jaccard_weight) * nll
    if jaccard_weight:
        eps = 1e-15
        prob = jnp.exp(ls)
        for cls in range(num_classes):
            jt = (targets_nhw == cls).astype(jnp.float32)
            jo = prob[:, cls]
            inter = jnp.sum(jo * jt)
            union = jnp.sum(jo) + jnp.sum(jt)
            loss = loss - jnp.log((inter + eps) / (union - inter + eps)) \
                * jaccard_weight / num_classes
    return loss


if __name__ == "__main__":
    N, C, H, W = 2, 4, 16, 16
    num_classes = C
    jaccard_weight = 0.3      # deterministic module "parameters"

    key = jax.random.PRNGKey(0)
    k_logits, k_tgt = jax.random.split(key)
    logits = jax.random.normal(k_logits, (N, C, H, W), dtype=jnp.float32)
    targets = jax.random.randint(k_tgt, (N, H, W), 0, num_classes, dtype=jnp.int32)

    loss = loss_multi(logits, targets,
                      num_classes=num_classes, jaccard_weight=jaccard_weight)
    loss = jax.block_until_ready(loss)

    # Also exercise the specialized jaccard_weight == 0 (NLL-only) path.
    loss0 = jax.block_until_ready(
        loss_multi(logits, targets, num_classes=num_classes, jaccard_weight=0.0))

    ref = _loss_multi_ref(logits, targets, num_classes, jaccard_weight)
    ref0 = _loss_multi_ref(logits, targets, num_classes, 0.0)
    # Slightly looser tolerance: pl.reciprocal(approx=True) feeds the summed
    # Jaccard statistics only.
    assert jnp.allclose(loss, ref, rtol=1e-3, atol=1e-4), (loss, ref)
    assert jnp.allclose(loss0, ref0, rtol=1e-4, atol=1e-5), (loss0, ref0)

    print("KERNEL_OK")
</pallas_src>

<mosaic_0001>
module attributes {stable_mosaic.version = 11 : i64} {
  func.func @_loss_multi_kernel(%arg0: i32, %arg1: i32, %arg2: i32, %arg3: memref<1x4x2x128xf32, #tpu.memory_space<vmem>>, %arg4: memref<1x1x2x128xi32, #tpu.memory_space<vmem>>, %arg5: memref<1x1x2x128xf32, #tpu.memory_space<vmem>>, %arg6: memref<1x1x8x2x128xf32, #tpu.memory_space<vmem>>) attributes {dimension_semantics = [#tpu.dimension_semantics<parallel>, #tpu.dimension_semantics<parallel>, #tpu.dimension_semantics<arbitrary>], iteration_bounds = array<i64: 2, 1, 1>, scalar_prefetch = 0 : i64, scratch_operands = 0 : i64, tpu.core_type = #tpu.core_type<tc>, window_params = [{transform_indices = @transform_0, window_bounds = array<i64: 1, 4, 2, 128>}, {transform_indices = @transform_1, window_bounds = array<i64: 1, 1, 2, 128>}, {transform_indices = @transform_2, window_bounds = array<i64: 1, 1, 2, 128>}, {transform_indices = @transform_3, window_bounds = array<i64: 1, 1, 8, 2, 128>}]} {
    %c0_i32 = arith.constant 0 : i32
    %0 = arith.cmpi eq, %arg2, %c0_i32 : i32
    %1 = arith.extui %0 : i1 to i32
    %c0_i32_0 = arith.constant 0 : i32
    %2 = arith.cmpi ne, %1, %c0_i32_0 : i32
    scf.if %2 {
      %cst_39 = arith.constant 0.000000e+00 : f32
      %47 = vector.broadcast %cst_39 : f32 to vector<1x1x2x128xf32>
      %c0_40 = arith.constant 0 : index
      %c0_41 = arith.constant 0 : index
      %c0_42 = arith.constant 0 : index
      %c0_43 = arith.constant 0 : index
      %48 = vector.load %arg5[%c0_40, %c0_41, %c0_42, %c0_43] : memref<1x1x2x128xf32, #tpu.memory_space<vmem>>, vector<1x1x2x128xf32>
      tpu.vector_store %arg5[%c0_40, %c0_41, %c0_42, %c0_43], %47 {strides = array<i32>} : memref<1x1x2x128xf32, #tpu.memory_space<vmem>>, vector<1x1x2x128xf32>,
      %cst_44 = arith.constant 0.000000e+00 : f32
      %49 = vector.broadcast %cst_44 : f32 to vector<1x1x8x2x128xf32>
      %c0_45 = arith.constant 0 : index
      %c0_46 = arith.constant 0 : index
      %c0_47 = arith.constant 0 : index
      %c0_48 = arith.constant 0 : index
      %c0_49 = arith.constant 0 : index
      %50 = vector.load %arg6[%c0_45, %c0_46, %c0_47, %c0_48, %c0_49] : memref<1x1x8x2x128xf32, #tpu.memory_space<vmem>>, vector<1x1x8x2x128xf32>
      tpu.vector_store %arg6[%c0_45, %c0_46, %c0_47, %c0_48, %c0_49], %49 {strides = array<i32>} : memref<1x1x8x2x128xf32, #tpu.memory_space<vmem>>, vector<1x1x8x2x128xf32>,
    } else {
    }
    %c0 = arith.constant 0 : index
    %c0_1 = arith.constant 0 : index
    %c0_2 = arith.constant 0 : index
    %c0_3 = arith.constant 0 : index
    %3 = vector.load %arg3[%c0, %c0_1, %c0_2, %c0_3] : memref<1x4x2x128xf32, #tpu.memory_space<vmem>>, vector<1x4x2x128xf32>
    %4 = vector.shape_cast %3 : vector<1x4x2x128xf32> to vector<4x2x128xf32>
    %c0_4 = arith.constant 0 : index
    %c0_5 = arith.constant 0 : index
    %c0_6 = arith.constant 0 : index
    %c0_7 = arith.constant 0 : index
    %5 = vector.load %arg4[%c0_4, %c0_5, %c0_6, %c0_7] : memref<1x1x2x128xi32, #tpu.memory_space<vmem>>, vector<1x1x2x128xi32>
    %6 = vector.shape_cast %5 : vector<1x1x2x128xi32> to vector<1x2x128xi32>
    %cst = arith.constant dense<0xFF800000> : vector<2x128xf32>
    %7 = vector.multi_reduction <maximumf>, %4, %cst [0] : vector<4x2x128xf32> to vector<2x128xf32>
    %8 = vector.shape_cast %7 : vector<2x128xf32> to vector<1x2x128xf32>
    %9 = vector.broadcast %8 : vector<1x2x128xf32> to vector<4x2x128xf32>
    %10 = arith.subf %4, %9 : vector<4x2x128xf32>
    %11 = math.exp %10 : vector<4x2x128xf32>
    %cst_8 = arith.constant dense<0.000000e+00> : vector<2x128xf32>
    %12 = vector.multi_reduction <add>, %11, %cst_8 [0] : vector<4x2x128xf32> to vector<2x128xf32>
    %13 = vector.shape_cast %12 : vector<2x128xf32> to vector<1x2x128xf32>
    %14 = math.log %13 : vector<1x2x128xf32>
    %15 = tpu.iota {dimensions = array<i32: 0>} : vector<4x2x128xi32>
    %16 = vector.broadcast %6 : vector<1x2x128xi32> to vector<4x2x128xi32>
    %17 = arith.cmpi eq, %15, %16 : vector<4x2x128xi32>
    %cst_9 = arith.constant 0.000000e+00 : f32
    %18 = vector.broadcast %cst_9 : f32 to vector<4x2x128xf32>
    %19 = arith.select %17, %10, %18 : vector<4x2x128xi1>, vector<4x2x128xf32>
    %cst_10 = arith.constant dense<0.000000e+00> : vector<2x128xf32>
    %20 = vector.multi_reduction <add>, %19, %cst_10 [0] : vector<4x2x128xf32> to vector<2x128xf32>
    %21 = vector.shape_cast %20 : vector<2x128xf32> to vector<1x2x128xf32>
    %c0_11 = arith.constant 0 : index
    %c0_12 = arith.constant 0 : index
    %c0_13 = arith.constant 0 : index
    %c0_14 = arith.constant 0 : index
    %22 = vector.load %arg5[%c0_11, %c0_12, %c0_13, %c0_14] : memref<1x1x2x128xf32, #tpu.memory_space<vmem>>, vector<1x1x2x128xf32>
    %23 = vector.shape_cast %22 : vector<1x1x2x128xf32> to vector<2x128xf32>
    %24 = arith.subf %14, %21 : vector<1x2x128xf32>
    %25 = vector.shape_cast %24 : vector<1x2x128xf32> to vector<2x128xf32>
    %26 = arith.addf %23, %25 : vector<2x128xf32>
    %c0_15 = arith.constant 0 : index
    %c0_16 = arith.constant 0 : index
    %c0_17 = arith.constant 0 : index
    %c0_18 = arith.constant 0 : index
    %27 = vector.load %arg5[%c0_15, %c0_16, %c0_17, %c0_18] : memref<1x1x2x128xf32, #tpu.memory_space<vmem>>, vector<1x1x2x128xf32>
    %28 = vector.shape_cast %27 : vector<1x1x2x128xf32> to vector<2x128xf32>
    %29 = vector.shape_cast %26 : vector<2x128xf32> to vector<1x1x2x128xf32>
    tpu.vector_store %arg5[%c0_15, %c0_16, %c0_17, %c0_18], %29 {strides = array<i32>} : memref<1x1x2x128xf32, #tpu.memory_space<vmem>>, vector<1x1x2x128xf32>,
    %30 = tpu.reciprocal %13 {approx = true} : vector<1x2x128xf32> -> vector<1x2x128xf32>
    %31 = vector.broadcast %30 : vector<1x2x128xf32> to vector<4x2x128xf32>
    %32 = arith.mulf %11, %31 : vector<4x2x128xf32>
    %c0_19 = arith.constant 0 : index
    %c0_20 = arith.constant 0 : index
    %c0_21 = arith.constant 0 : index
    %c0_22 = arith.constant 0 : index
    %c0_23 = arith.constant 0 : index
    %33 = vector.load %arg6[%c0_19, %c0_20, %c0_21, %c0_22, %c0_23] : memref<1x1x8x2x128xf32, #tpu.memory_space<vmem>>, vector<1x1x4x2x128xf32>
    %34 = vector.shape_cast %33 : vector<1x1x4x2x128xf32> to vector<4x2x128xf32>
    %35 = arith.addf %34, %32 : vector<4x2x128xf32>
    %c0_24 = arith.constant 0 : index
    %c0_25 = arith.constant 0 : index
    %c0_26 = arith.constant 0 : index
    %c0_27 = arith.constant 0 : index
    %c0_28 = arith.constant 0 : index
    %36 = vector.load %arg6[%c0_24, %c0_25, %c0_26, %c0_27, %c0_28] : memref<1x1x8x2x128xf32, #tpu.memory_space<vmem>>, vector<1x1x4x2x128xf32>
    %37 = vector.shape_cast %36 : vector<1x1x4x2x128xf32> to vector<4x2x128xf32>
    %38 = vector.shape_cast %35 : vector<4x2x128xf32> to vector<1x1x4x2x128xf32>
    tpu.vector_store %arg6[%c0_24, %c0_25, %c0_26, %c0_27, %c0_28], %38 {strides = array<i32>} : memref<1x1x8x2x128xf32, #tpu.memory_space<vmem>>, vector<1x1x4x2x128xf32>,
    %c0_29 = arith.constant 0 : index
    %c0_30 = arith.constant 0 : index
    %c4 = arith.constant 4 : index
    %c0_31 = arith.constant 0 : index
    %c0_32 = arith.constant 0 : index
    %39 = vector.load %arg6[%c0_29, %c0_30, %c4, %c0_31, %c0_32] : memref<1x1x8x2x128xf32, #tpu.memory_space<vmem>>, vector<1x1x4x2x128xf32>
    %40 = vector.shape_cast %39 : vector<1x1x4x2x128xf32> to vector<4x2x128xf32>
    %cst_33 = arith.constant 0.000000e+00 : f32
    %41 = vector.broadcast %cst_33 : f32 to vector<4x2x128xf32>
    %42 = arith.select %17, %32, %41 : vector<4x2x128xi1>, vector<4x2x128xf32>
    %43 = arith.addf %40, %42 : vector<4x2x128xf32>
    %c0_34 = arith.constant 0 : index
    %c0_35 = arith.constant 0 : index
    %c4_36 = arith.constant 4 : index
    %c0_37 = arith.constant 0 : index
    %c0_38 = arith.constant 0 : index
    %44 = vector.load %arg6[%c0_34, %c0_35, %c4_36, %c0_37, %c0_38] : memref<1x1x8x2x128xf32, #tpu.memory_space<vmem>>, vector<1x1x4x2x128xf32>
    %45 = vector.shape_cast %44 : vector<1x1x4x2x128xf32> to vector<4x2x128xf32>
    %46 = vector.shape_cast %43 : vector<4x2x128xf32> to vector<1x1x4x2x128xf32>
    tpu.vector_store %arg6[%c0_34, %c0_35, %c4_36, %c0_37, %c0_38], %46 {strides = array<i32>} : memref<1x1x8x2x128xf32, #tpu.memory_space<vmem>>, vector<1x1x4x2x128xf32>,
    return
  }
  func.func @transform_0(%arg0: i32, %arg1: i32, %arg2: i32) -> (i32, i32, i32, i32) {
    %c1_i32 = arith.constant 1 : i32
    %0 = arith.muli %arg1, %c1_i32 : i32
    %1 = arith.addi %0, %arg2 : i32
    %c0_i32 = arith.constant 0 : i32
    %c0_i32_0 = arith.constant 0 : i32
    %c0_i32_1 = arith.constant 0 : i32
    return %arg0, %c0_i32, %1, %c0_i32_0 : i32, i32, i32, i32
  }
  func.func @transform_1(%arg0: i32, %arg1: i32, %arg2: i32) -> (i32, i32, i32, i32) {
    %c1_i32 = arith.constant 1 : i32
    %0 = arith.muli %arg1, %c1_i32 : i32
    %1 = arith.addi %0, %arg2 : i32
    %c0_i32 = arith.constant 0 : i32
    %c0_i32_0 = arith.constant 0 : i32
    %c0_i32_1 = arith.constant 0 : i32
    return %arg0, %c0_i32, %1, %c0_i32_0 : i32, i32, i32, i32
  }
  func.func @transform_2(%arg0: i32, %arg1: i32, %arg2: i32) -> (i32, i32, i32, i32) {
    %c0_i32 = arith.constant 0 : i32
    %c0_i32_0 = arith.constant 0 : i32
    %c0_i32_1 = arith.constant 0 : i32
    return %arg0, %arg1, %c0_i32, %c0_i32_0 : i32, i32, i32, i32
  }
  func.func @transform_3(%arg0: i32, %arg1: i32, %arg2: i32) -> (i32, i32, i32, i32, i32) {
    %c0_i32 = arith.constant 0 : i32
    %c0_i32_0 = arith.constant 0 : i32
    %c0_i32_1 = arith.constant 0 : i32
    %c0_i32_2 = arith.constant 0 : i32
    return %arg0, %arg1, %c0_i32, %c0_i32_0, %c0_i32_1 : i32, i32, i32, i32, i32
  }
}

</mosaic_0001>

<llo_original>
// kernel: eq.1
$region0: #{eq.1}
  %s0 = inlined_call_operand.vmem [shape: s32[2,16,16], index: 0, kind: input, shape index: {}]
  %s1 = inlined_call_operand.vmem [shape: s32[512], index: 1, kind: output, shape index: {}]
  $region1: #{eq.1} parent=0
    #allocation0 [shape = 'u8[4096]{0}', space=vmem, size = 0x1000, scoped, tag = 'scoped mem for output reshape']
    %v2 = vld [vmem:[%s0] ss:$8 sm:$0xf]
    %vm3 = vcmask 130048
    %4 = vst.msk [vmem:[#allocation0] sm:$0xf] %vm3, %v2
    %s5 = scalar_lea.vmem %s0, 7
    %v6 = vld [vmem:[%s5] ss:$8 sm:$0xf]
    %7 = vrot.lane.b32.xlu0 %v6, 112
    %v8 = vpop.permute.xlu0 %7
    %vm9 = vcmask 1048448
    %10 = vst.msk [vmem:[#allocation0] sm:$0xf] %vm9, %v8
    %s11 = scalar_lea.vmem %s0, 6
    %v12 = vld [vmem:[%s11] ss:$8 sm:$0xf]
    %13 = vrot.lane.b32.xlu0 %v12, 96
    %v14 = vpop.permute.xlu0 %13
    %vm15 = vcmask 917248
    %16 = vst.msk [vmem:[#allocation0] sm:$0xf] %vm15, %v14
    %s17 = scalar_lea.vmem %s0, 5
    %v18 = vld [vmem:[%s17] ss:$8 sm:$0xf]
    %19 = vrot.lane.b32.xlu0 %v18, 80
    %v20 = vpop.permute.xlu0 %19
    %vm21 = vcmask 786048
    %22 = vst.msk [vmem:[#allocation0] sm:$0xf] %vm21, %v20
    %s23 = scalar_lea.vmem %s0, 4
    %v24 = vld [vmem:[%s23] ss:$8 sm:$0xf]
    %25 = vrot.lane.b32.xlu0 %v24, 64
    %v26 = vpop.permute.xlu0 %25
    %vm27 = vcmask 654848
    %28 = vst.msk [vmem:[#allocation0] sm:$0xf] %vm27, %v26
    %s29 = scalar_lea.vmem %s0, 3
    %v30 = vld [vmem:[%s29] ss:$8 sm:$0xf]
    %31 = vrot.lane.b32.xlu0 %v30, 48
    %v32 = vpop.permute.xlu0 %31
    %vm33 = vcmask 523648
    %34 = vst.msk [vmem:[#allocation0] sm:$0xf] %vm33, %v32
    %s35 = scalar_lea.vmem %s0, 2
    %v36 = vld [vmem:[%s35] ss:$8 sm:$0xf]
    %37 = vrot.lane.b32.xlu0 %v36, 32
    %v38 = vpop.permute.xlu0 %37
    %vm39 = vcmask 392448
    %40 = vst.msk [vmem:[#allocation0] sm:$0xf] %vm39, %v38
    %s41 = scalar_lea.vmem %s0, 1
    %v42 = vld [vmem:[%s41] ss:$8 sm:$0xf]
    %43 = vrot.lane.b32.xlu0 %v42, 16
    %v44 = vpop.permute.xlu0 %43
    %vm45 = vcmask 261248
    %46 = vst.msk [vmem:[#allocation0] sm:$0xf] %vm45, %v44
    %s48 = sshllo.u32 0, 4
    %v50 = vld [vmem:[#allocation0] sm:%s48]
    %s51 = sshllo.u32 0, 4
    %52 = vst [vmem:[%s1] sm:%s51] %v50

// kernel: loss_multi.1
$region0: #{loss_multi.1}
  #allocation0 [shape = 'u32[]', space=smem, size = 0x4, offset = 0x4, fixed_abs, tag = 'smem constant byte address 0x4 - core index']
  #allocation1 [shape = 'u32[144,128]{1,0:T(1,128)}', space=vmem, size = 0x12000, scoped, tag = 'internal scratch']
  %s0 = inlined_call_operand.vmem [shape: f32[2,4,2,128], index: 0, kind: input, shape index: {}]
  %s1 = inlined_call_operand.vmem [shape: s32[2,1,2,128], index: 1, kind: input, shape index: {}]
  %s2 = inlined_call_operand.vmem [shape: f32[2,1,2,128], index: 2, kind: output, shape index: {0}]
  %s3 = inlined_call_operand.vmem [shape: f32[2,1,8,2,128], index: 3, kind: output, shape index: {1}]
  %4 = xla_tuple %s2, %s3
  %s5 = sld [smem:[#allocation0]]
  $region53: #{loss_multi.1} parent=0
    _
  %s7 = ssub.s32 1, %s5
  %s8 = scalar_select 0, %s7, %s5
  loop: start=0, step=1, limit=4
  $region2: #{loss_multi.1} parent=0 // loop_pre_header
    _
  $region3: #{loss_multi.1} parent=0 // loop_header
    %s10 = sphi 0, %s14
    %p11 = scmp.ge.s32.totalorder %s10, 4
    %s17 = sphi 0, %s36
    %s18 = sphi 0, %s32
    %s19 = sphi 0, %s28
    %s20 = sphi 0, %s17
    %s21 = sphi 0, %s18
    %s22 = sphi 0, %s19
    %s23 = sphi 0, %s20
    %s24 = sphi 0, %s21
    %s25 = sphi 0, %s22
    %s43 = sphi 0, %s45
    %s46 = sphi 0, %s43
    %s47 = sphi 0, %s46
    %s63 = sphi 0, %s47
    %s73 = sphi 0, %s75
    %s76 = sphi 0, %s73
    %s77 = sphi 0, %s76
    %s93 = sphi 0, %s77
    %s101 = sphi 0, %s103
    %s104 = sphi 0, %s101
    %s105 = sphi 0, %s104
    %s121 = sphi 0, %s105
    %s129 = sphi 0, %s131
    %s132 = sphi 0, %s129
    %s133 = sphi 0, %s132
    %s149 = sphi 0, %s133
  $region4: #{loss_multi.1} parent=0 // loop_header_branch
    %13 = sbr.rel (%p11) target = $region8
  $region5: #{loss_multi.1} parent=0 // loop_body
    %s15 = ssub.s32 %s10, 1
    %s16 = ssub.s32 %s10, 2
    %s26 = sadd.s32 1, %s19
    %p27 = scmp.ge.s32.totalorder %s26, 1
    %s28 = scalar_select %p27, 0, %s26
    %s29 = sadd.s32 1, %s18
    %s30 = scalar_select %p27, %s29, %s18
    %p31 = scmp.ge.s32.totalorder %s30, 1
    %s32 = scalar_select %p31, 0, %s30
    %s33 = sadd.s32 1, %s17
    %s34 = scalar_select %p31, %s33, %s17
    %p35 = scmp.ge.s32.totalorder %s34, 2
    %s36 = scalar_select %p35, 0, %s34
    %s37 = sadd.s32 %s18, %s19
    %s38 = sadd.s32 %s32, %s28
    %s39 = ssub.s32 %s17, %s36
    %s40 = ssub.s32 %s37, %s38
    %s41 = sor.u32 %s39, %s40
    %p42 = scmp.eq.s32.totalorder %s41, 0
    %s44 = sadd.s32 %s43, 1
    %s45 = scalar_select %p42, %s43, %s44
    %p48 = pneg %p42
    %p49 = scmp.eq.s32.totalorder %s10, 1
    %p50 = por %p48, %p49
    %p51 = scmp.ne.s32.totalorder %s43, %s46
    %p52 = scmp.eq.s32.totalorder %s10, 0
    %p53 = por %p51, %p52
    %p54 = scmp.ne.s32.totalorder %s43, %s46
    %p55 = scmp.eq.s32.totalorder %s15, 1
    %p56 = por %p54, %p55
    %p57 = scmp.ne.s32.totalorder %s46, %s47
    %p58 = scmp.eq.s32.totalorder %s15, 0
    %p59 = por %p57, %p58
    %p60 = scmp.ne.s32.totalorder %s46, %s47
    %p61 = scmp.eq.s32.totalorder %s16, 1
    %p62 = por %p60, %p61
    %p64 = scmp.ne.s32.totalorder %s47, %s63
    %p65 = scmp.eq.s32.totalorder %s16, 0
    %p66 = por %p64, %p65
    %s67 = sadd.s32 %s18, %s19
    %s68 = sadd.s32 %s32, %s28
    %s69 = ssub.s32 %s17, %s36
    %s70 = ssub.s32 %s67, %s68
    %s71 = sor.u32 %s69, %s70
    %p72 = scmp.eq.s32.totalorder %s71, 0
    %s74 = sadd.s32 %s73, 1
    %s75 = scalar_select %p72, %s73, %s74
    %p78 = pneg %p72
    %p79 = scmp.eq.s32.totalorder %s10, 1
    %p80 = por %p78, %p79
    %p81 = scmp.ne.s32.totalorder %s73, %s76
    %p82 = scmp.eq.s32.totalorder %s10, 0
    %p83 = por %p81, %p82
    %p84 = scmp.ne.s32.totalorder %s73, %s76
    %p85 = scmp.eq.s32.totalorder %s15, 1
    %p86 = por %p84, %p85
    %p87 = scmp.ne.s32.totalorder %s76, %s77
    %p88 = scmp.eq.s32.totalorder %s15, 0
    %p89 = por %p87, %p88
    %p90 = scmp.ne.s32.totalorder %s76, %s77
    %p91 = scmp.eq.s32.totalorder %s16, 1
    %p92 = por %p90, %p91
    %p94 = scmp.ne.s32.totalorder %s77, %s93
    %p95 = scmp.eq.s32.totalorder %s16, 0
    %p96 = por %p94, %p95
    %s97 = ssub.s32 %s17, %s36
    %s98 = ssub.s32 %s18, %s32
    %s99 = sor.u32 %s97, %s98
    %p100 = scmp.eq.s32.totalorder %s99, 0
    %s102 = sadd.s32 %s101, 1
    %s103 = scalar_select %p100, %s101, %s102
    %p106 = pneg %p100
    %p107 = scmp.eq.s32.totalorder %s10, 1
    %p108 = por %p106, %p107
    %p109 = scmp.ne.s32.totalorder %s101, %s104
    %p110 = scmp.eq.s32.totalorder %s10, 0
    %p111 = por %p109, %p110
    %p112 = scmp.ne.s32.totalorder %s101, %s104
    %p113 = scmp.eq.s32.totalorder %s15, 1
    %p114 = por %p112, %p113
    %p115 = scmp.ne.s32.totalorder %s104, %s105
    %p116 = scmp.eq.s32.totalorder %s15, 0
    %p117 = por %p115, %p116
    %p118 = scmp.ne.s32.totalorder %s104, %s105
    %p119 = scmp.eq.s32.totalorder %s16, 1
    %p120 = por %p118, %p119
    %p122 = scmp.ne.s32.totalorder %s105, %s121
    %p123 = scmp.eq.s32.totalorder %s16, 0
    %p124 = por %p122, %p123
    %s125 = ssub.s32 %s17, %s36
    %s126 = ssub.s32 %s18, %s32
    %s127 = sor.u32 %s125, %s126
    %p128 = scmp.eq.s32.totalorder %s127, 0
    %s130 = sadd.s32 %s129, 1
    %s131 = scalar_select %p128, %s129, %s130
    %p134 = pneg %p128
    %p135 = scmp.eq.s32.totalorder %s10, 1
    %p136 = por %p134, %p135
    %p137 = scmp.ne.s32.totalorder %s129, %s132
    %p138 = scmp.eq.s32.totalorder %s10, 0
    %p139 = por %p137, %p138
    %p140 = scmp.ne.s32.totalorder %s129, %s132
    %p141 = scmp.eq.s32.totalorder %s15, 1
    %p142 = por %p140, %p141
    %p143 = scmp.ne.s32.totalorder %s132, %s133
    %p144 = scmp.eq.s32.totalorder %s15, 0
    %p145 = por %p143, %p144
    %p146 = scmp.ne.s32.totalorder %s132, %s133
    %p147 = scmp.eq.s32.totalorder %s16, 1
    %p148 = por %p146, %p147
    %p150 = scmp.ne.s32.totalorder %s133, %s149
    %p151 = scmp.eq.s32.totalorder %s16, 0
    %p152 = por %p150, %p151
    %p153 = scmp.le.s32.totalorder 1, %s10
    %p154 = scmp.lt.s32.totalorder %s10, 3
    %p155 = pnand %p153, %p154
    %p156 = pneg %p155
    // Predicated region
    $region9: #{loss_multi.1} parent=5 // pred_check
      _
    $region10: #{loss_multi.1} parent=5 // pred_check_branch
      %158 = sbr.rel (%p155) target = $region12
    $region11: #{loss_multi.1} parent=5 // pred_region
      %s159 = ssub.s32 %s10, 1
    $region12: #{loss_multi.1} parent=5 // pred_fallthru
      _
    %p160 = scmp.lt.s32.totalorder %s10, 2
    // Predicated region
    $region13: #{loss_multi.1} parent=5 // pred_check
      %p161 = pneg %p160
    $region14: #{loss_multi.1} parent=5 // pred_check_branch
      %163 = sbr.rel (%p161) target = $region16
    $region15: #{loss_multi.1} parent=5 // pred_region
      // Predicated region
      $region17: #{loss_multi.1} parent=15 // pred_check
        %p164 = pneg %p53
      $region18: #{loss_multi.1} parent=15 // pred_check_branch
        %166 = sbr.rel (%p164) target = $region20
      $region19: #{loss_multi.1} parent=15 // pred_region
        %s167 = sadd.s32 %s18, %s19
        %p168 = scmp.lt.s32.totalorder %s17, 1
        %s169 = scalar_select %p168, %s17, 1
        %p170 = scmp.lt.s32.totalorder %s167, 0
        %s171 = scalar_select %p170, %s167, 0
        %s172 = smul.addr %s169, 4
        %s173 = sadd.s32 %s171, %s172
        %s174 = smul.addr %s173, 2
        %s175 = scalar_lea.vmem %s0, %s174
        %s176 = sadd.s32 %s18, %s19
      $region20: #{loss_multi.1} parent=15 // pred_fallthru
        _
      // Predicated region
      $region21: #{loss_multi.1} parent=15 // pred_check
        %p177 = pneg %p83
      $region22: #{loss_multi.1} parent=15 // pred_check_branch
        %179 = sbr.rel (%p177) target = $region24
      $region23: #{loss_multi.1} parent=15 // pred_region
        %s180 = sadd.s32 %s18, %s19
        %p181 = scmp.lt.s32.totalorder %s17, 1
        %s182 = scalar_select %p181, %s17, 1
        %p183 = scmp.lt.s32.totalorder %s180, 0
        %s184 = scalar_select %p183, %s180, 0
        %s185 = sadd.s32 %s184, %s182
        %s186 = smul.addr %s185, 2
        %s187 = scalar_lea.vmem %s1, %s186
        %s188 = sadd.s32 %s18, %s19
      $region24: #{loss_multi.1} parent=15 // pred_fallthru
        _
    $region16: #{loss_multi.1} parent=5 // pred_fallthru
      _
    %p189 = scmp.le.s32.totalorder 1, %s10
    %p190 = scmp.lt.s32.totalorder %s10, 3
    %p191 = pnand %p189, %p190
    %p192 = pneg %p191
    // Predicated region
    $region25: #{loss_multi.1} parent=5 // pred_check
      _
    $region26: #{loss_multi.1} parent=5 // pred_check_branch
      %194 = sbr.rel (%p191) target = $region28
    $region27: #{loss_multi.1} parent=5 // pred_region
      %s195 = ssub.s32 %s10, 1
      %s196 = sadd.s32 %s21, %s22
      %p197 = scmp.lt.s32.totalorder %s20, 1
      %s198 = scalar_select %p197, %s20, 1
      %p199 = scmp.lt.s32.totalorder %s196, 0
      %s200 = scalar_select %p199, %s196, 0
      %s201 = smul.addr %s198, 4
      %s202 = sadd.s32 %s200, %s201
      %s203 = smul.addr %s202, 2
      %s204 = scalar_lea.vmem %s0, %s203
      %p205 = pneg %p59
      %p206 = pneg %p56
      %s207 = sadd.s32 %s21, %s22
      %p208 = scmp.lt.s32.totalorder %s20, 1
      %s209 = scalar_select %p208, %s20, 1
      %p210 = scmp.lt.s32.totalorder %s207, 0
      %s211 = scalar_select %p210, %s207, 0
      %s212 = sadd.s32 %s211, %s209
      %s213 = smul.addr %s212, 2
      %s214 = scalar_lea.vmem %s1, %s213
      %p215 = pneg %p89
      %p216 = pneg %p86
      %p217 = pneg %p117
      %p218 = pneg %p114
      %p219 = scmp.lt.s32.totalorder %s20, 1
      %s220 = scalar_select %p219, %s20, 1
      %p221 = scmp.lt.s32.totalorder %s21, 0
      %s222 = scalar_select %p221, %s21, 0
      %s223 = sadd.s32 %s222, %s220
      %s224 = smul.addr %s223, 2
      %s225 = scalar_lea.vmem %s2, %s224
      %p226 = pneg %p145
      %p227 = pneg %p142
      %p228 = scmp.lt.s32.totalorder %s20, 1
      %s229 = scalar_select %p228, %s20, 1
      %p230 = scmp.lt.s32.totalorder %s21, 0
      %s231 = scalar_select %p230, %s21, 0
      %s232 = smul.addr %s231, 8
      %s233 = smul.addr %s229, 8
      %s234 = sadd.s32 %s232, %s233
      %s235 = smul.addr %s234, 2
      %s236 = scalar_lea.vmem %s3, %s235
      %s237 = sadd.s32 %s21, %s22
      %p238 = scmp.lt.s32.totalorder %s20, 1
      %s239 = scalar_select %p238, %s20, 1
      %p240 = scmp.lt.s32.totalorder %s237, 0
      %s241 = scalar_select %p240, %s237, 0
      %s242 = smul.addr %s239, 4
      %s243 = sadd.s32 %s241, %s242
      %s244 = smul.addr %s243, 2
      %s245 = scalar_lea.vmem %s0, %s244
      %s246 = sadd.s32 %s21, %s22
      %s247 = sadd.s32 %s21, %s22
      %p248 = scmp.lt.s32.totalorder %s20, 1
      %s249 = scalar_select %p248, %s20, 1
      %p250 = scmp.lt.s32.totalorder %s247, 0
      %s251 = scalar_select %p250, %s247, 0
      %s252 = sadd.s32 %s251, %s249
      %s253 = smul.addr %s252, 2
      %s254 = scalar_lea.vmem %s1, %s253
      %s255 = sadd.s32 %s21, %s22
      %p256 = scmp.lt.s32.totalorder %s20, 1
      %s257 = scalar_select %p256, %s20, 1
      %p258 = scmp.lt.s32.totalorder %s21, 0
      %s259 = scalar_select %p258, %s21, 0
      %s260 = sadd.s32 %s259, %s257
      %s261 = smul.addr %s260, 2
      %s262 = scalar_lea.vmem %s2, %s261
      %p263 = scmp.lt.s32.totalorder %s20, 1
      %s264 = scalar_select %p263, %s20, 1
      %p265 = scmp.lt.s32.totalorder %s21, 0
      %s266 = scalar_select %p265, %s21, 0
      %s267 = smul.addr %s266, 8
      %s268 = smul.addr %s264, 8
      %s269 = sadd.s32 %s267, %s268
      %s270 = smul.addr %s269, 2
      %s271 = scalar_lea.vmem %s3, %s270
      %p272 = scmp.eq.s32.totalorder %s22, 0
      // Predicated region
      $region29: #{loss_multi.1} parent=27 // pred_check
        %p273 = pneg %p272
      $region30: #{loss_multi.1} parent=27 // pred_check_branch
        %275 = sbr.rel (%p273) target = $region32
      $region31: #{loss_multi.1} parent=27 // pred_region
        %276 = vst [vmem:[%s262] sm:$0x3] 0.0
        %277 = vst [vmem:[%s271] sm:$0x3] 0.0
        %278 = vst [vmem:[%s271 + $0x2] sm:$0x3] 0.0
        %279 = vst [vmem:[%s271 + $0x4] sm:$0x3] 0.0
        %280 = vst [vmem:[%s271 + $0x6] sm:$0x3] 0.0
        %281 = vst [vmem:[%s271 + $0x8] sm:$0x3] 0.0
        %282 = vst [vmem:[%s271 + $0xa] sm:$0x3] 0.0
        %283 = vst [vmem:[%s271 + $0xc] sm:$0x3] 0.0
        %284 = vst [vmem:[%s271 + $0xe] sm:$0x3] 0.0
      $region32: #{loss_multi.1} parent=27 // pred_fallthru
        _
      %v285 = vld [vmem:[%s245] sm:$0x3]
      %v286 = vld [vmem:[%s245 + $0x2] sm:$0x3]
      %v287 = vld [vmem:[%s245 + $0x4] sm:$0x3]
      %v288 = vld [vmem:[%s245 + $0x6] sm:$0x3]
      %v289 = vld [vmem:[%s254] sm:$0x3]
      %vm290 = vcmask 1041408
      %v291 = vsel %vm290, %v285, -inf
      %v292 = vsel %vm290, %v286, -inf
      %v293 = vsel %vm290, %v287, -inf
      %v294 = vsel %vm290, %v288, -inf
      %v295 = vmax.f32 %v291, %v292
      %v296 = vmax.f32 %v293, %v294
      %v297 = vmax.f32 %v295, %v296
      %v298 = vsub.f32 %v285, %v297
      %v299 = vsub.f32 %v286, %v297
      %v300 = vsub.f32 %v287, %v297
      %v301 = vsub.f32 %v288, %v297
      %v302 = vmul.f32 %v298, 1.442695
      %v303 = vpow.pop %v302
      %v304 = vmul.f32 %v299, 1.442695
      %v305 = vpow.pop %v304
      %v306 = vmul.f32 %v300, 1.442695
      %v307 = vpow.pop %v306
      %v308 = vmul.f32 %v301, 1.442695
      %v309 = vpow.pop %v308
      %v310 = vsel %vm290, %v303, 0.0
      %v311 = vsel %vm290, %v305, 0.0
      %v312 = vadd.f32 %v310, %v311
      %v313 = vsel %vm290, %v307, 0.0
      %v314 = vadd.f32 %v312, %v313
      %v315 = vsel %vm290, %v309, 0.0
      %v316 = vadd.f32 %v314, %v315
      %v317 = vlog2.pop %v316
      %v318 = vmul.f32 %v317, 0.6931472
      %vm319 = vcmp.eq.s32.totalorder %v289, 0
      %vm320 = vcmp.eq.s32.totalorder %v289, 1
      %vm321 = vcmp.eq.s32.totalorder %v289, 2
      %vm322 = vcmp.eq.s32.totalorder %v289, 3
      %v323 = vsel %vm319, %v298, 0.0
      %v324 = vsel %vm320, %v299, 0.0
      %v325 = vsel %vm321, %v300, 0.0
      %v326 = vsel %vm322, %v301, 0.0
      %v327 = vsel %vm290, %v323, 0.0
      %v328 = vsel %vm290, %v324, 0.0
      %v329 = vadd.f32 %v327, %v328
      %v330 = vsel %vm290, %v325, 0.0
      %v331 = vadd.f32 %v329, %v330
      %v332 = vsel %vm290, %v326, 0.0
      %v333 = vadd.f32 %v331, %v332
      %v334 = vld [vmem:[%s262] sm:$0x3]
      %v335 = vsub.f32 %v318, %v333
      %v336 = vadd.f32 %v334, %v335
      %337 = vst [vmem:[%s262] sm:$0x3] %v336
      %v338 = vrcp.pop %v316
      %v339 = vmul.f32 %v303, %v338
      %v340 = vmul.f32 %v305, %v338
      %v341 = vmul.f32 %v307, %v338
      %v342 = vmul.f32 %v309, %v338
      %v343 = vld [vmem:[%s271] sm:$0x3]
      %v344 = vld [vmem:[%s271 + $0x2] sm:$0x3]
      %v345 = vld [vmem:[%s271 + $0x4] sm:$0x3]
      %v346 = vld [vmem:[%s271 + $0x6] sm:$0x3]
      %v347 = vadd.f32 %v343, %v339
      %v348 = vadd.f32 %v344, %v340
      %v349 = vadd.f32 %v345, %v341
      %v350 = vadd.f32 %v346, %v342
      %351 = vst [vmem:[%s271] sm:$0x3] %v347
      %352 = vst [vmem:[%s271 + $0x2] sm:$0x3] %v348
      %353 = vst [vmem:[%s271 + $0x4] sm:$0x3] %v349
      %354 = vst [vmem:[%s271 + $0x6] sm:$0x3] %v350
      %s355 = scalar_lea.vmem %s271, 8
      %v356 = vld [vmem:[%s355] sm:$0x3]
      %v357 = vld [vmem:[%s355 + $0x2] sm:$0x3]
      %v358 = vld [vmem:[%s355 + $0x4] sm:$0x3]
      %v359 = vld [vmem:[%s355 + $0x6] sm:$0x3]
      %v360 = vsel %vm319, %v339, 0.0
      %v361 = vsel %vm320, %v340, 0.0
      %v362 = vsel %vm321, %v341, 0.0
      %v363 = vsel %vm322, %v342, 0.0
      %v364 = vadd.f32 %v356, %v360
      %v365 = vadd.f32 %v357, %v361
      %v366 = vadd.f32 %v358, %v362
      %v367 = vadd.f32 %v359, %v363
      %368 = vst [vmem:[%s355] sm:$0x3] %v364
      %369 = vst [vmem:[%s355 + $0x2] sm:$0x3] %v365
      %370 = vst [vmem:[%s355 + $0x4] sm:$0x3] %v366
      %371 = vst [vmem:[%s355 + $0x6] sm:$0x3] %v367
      %p372 = scmp.lt.s32.totalorder %s20, 1
      %s373 = scalar_select %p372, %s20, 1
      %p374 = scmp.lt.s32.totalorder %s21, 0
      %s375 = scalar_select %p374, %s21, 0
      %s376 = sadd.s32 %s375, %s373
      %s377 = smul.addr %s376, 2
      %s378 = scalar_lea.vmem %s2, %s377
      %p379 = scmp.lt.s32.totalorder %s20, 1
      %s380 = scalar_select %p379, %s20, 1
      %p381 = scmp.lt.s32.totalorder %s21, 0
      %s382 = scalar_select %p381, %s21, 0
      %s383 = smul.addr %s382, 8
      %s384 = smul.addr %s380, 8
      %s385 = sadd.s32 %s383, %s384
      %s386 = smul.addr %s385, 2
      %s387 = scalar_lea.vmem %s3, %s386
      // Predicated region
      $region33: #{loss_multi.1} parent=27 // pred_check
        %p388 = pneg %p114
      $region34: #{loss_multi.1} parent=27 // pred_check_branch
        %390 = sbr.rel (%p388) target = $region36
      $region35: #{loss_multi.1} parent=27 // pred_region
        _
      $region36: #{loss_multi.1} parent=27 // pred_fallthru
        _
      // Predicated region
      $region37: #{loss_multi.1} parent=27 // pred_check
        %p391 = pneg %p142
      $region38: #{loss_multi.1} parent=27 // pred_check_branch
        %393 = sbr.rel (%p391) target = $region40
      $region39: #{loss_multi.1} parent=27 // pred_region
        _
      $region40: #{loss_multi.1} parent=27 // pred_fallthru
        _
    $region28: #{loss_multi.1} parent=5 // pred_fallthru
      _
    %p394 = scmp.le.s32.totalorder 2, %s10
    // Predicated region
    $region41: #{loss_multi.1} parent=5 // pred_check
      %p395 = pneg %p394
    $region42: #{loss_multi.1} parent=5 // pred_check_branch
      %397 = sbr.rel (%p395) target = $region44
    $region43: #{loss_multi.1} parent=5 // pred_region
      %s398 = ssub.s32 %s10, 2
      // Predicated region
      $region45: #{loss_multi.1} parent=43 // pred_check
        %p399 = pneg %p120
      $region46: #{loss_multi.1} parent=43 // pred_check_branch
        %401 = sbr.rel (%p399) target = $region48
      $region47: #{loss_multi.1} parent=43 // pred_region
        %p402 = scmp.lt.s32.totalorder %s23, 1
        %s403 = scalar_select %p402, %s23, 1
        %p404 = scmp.lt.s32.totalorder %s24, 0
        %s405 = scalar_select %p404, %s24, 0
        %s406 = sadd.s32 %s405, %s403
        %s407 = smul.addr %s406, 2
        %s408 = scalar_lea.vmem %s2, %s407
      $region48: #{loss_multi.1} parent=43 // pred_fallthru
        _
      // Predicated region
      $region49: #{loss_multi.1} parent=43 // pred_check
        %p409 = pneg %p148
      $region50: #{loss_multi.1} parent=43 // pred_check_branch
        %411 = sbr.rel (%p409) target = $region52
      $region51: #{loss_multi.1} parent=43 // pred_region
        %p412 = scmp.lt.s32.totalorder %s23, 1
        %s413 = scalar_select %p412, %s23, 1
        %p414 = scmp.lt.s32.totalorder %s24, 0
        %s415 = scalar_select %p414, %s24, 0
        %s416 = smul.addr %s415, 8
        %s417 = smul.addr %s413, 8
        %s418 = sadd.s32 %s416, %s417
        %s419 = smul.addr %s418, 2
        %s420 = scalar_lea.vmem %s3, %s419
      $region52: #{loss_multi.1} parent=43 // pred_fallthru
        _
    $region44: #{loss_multi.1} parent=5 // pred_fallthru
      _
  $region6: #{loss_multi.1} parent=0 // loop_footer
    %s14 = sadd.s32 1, %s10
  $region7: #{loss_multi.1} parent=0 // loop_footer_branch
    %9 = sbr.rel target = $region3
  $region8: #{loss_multi.1} parent=0 // loop_exit
    _

</llo_original>
